<compile_context>
chip_gen: v6e
topology: v6e:2x2x1
jax: 0.10.0
libtpu: 0.0.40
codegen_flags: <defaults>
</compile_context>

<pallas_src>
import math
import jax
import jax.numpy as jnp
from jax.experimental import pallas as pl
from jax.experimental.pallas import tpu as pltpu

_INV_SQRT2 = 1.0 / math.sqrt(2.0)


# ----------------------------------------------------------------------------- kernel

def _ffn_kernel(x_ref, w1_ref, b1_ref, w2_ref, b2_ref, o_ref, acc_ref):
    k = pl.program_id(1)

    @pl.when(k == 0)
    def _():
        # Initialize the accumulator with b2 (hoists the b2 add out of the reduction loop).
        acc_ref[...] = jnp.broadcast_to(b2_ref[...], acc_ref.shape)

    # h = x @ W1[:, k_tile] + b1[k_tile]   (bf16 MXU inputs, f32 accumulation)
    h = jnp.dot(x_ref[...], w1_ref[...], preferred_element_type=jnp.float32)
    h = h + b1_ref[...]

    # Exact (erf-based) GELU in f32 — matches torch.nn.GELU(approximate='none').
    h = 0.5 * h * (1.0 + jax.lax.erf(h * _INV_SQRT2))

    # Accumulate h @ W2[k_tile, :] into the f32 accumulator.
    acc_ref[...] += jnp.dot(h.astype(w2_ref.dtype), w2_ref[...],
                            preferred_element_type=jnp.float32)

    @pl.when(k == pl.num_programs(1) - 1)
    def _():
        o_ref[...] = acc_ref[...].astype(o_ref.dtype)


# ----------------------------------------------------------------------------- config

def _round_up(v, m):
    return (v + m - 1) // m * m


def _device_defaults():
    """Per-generation tiling defaults (roofline-derived, see perf review)."""
    try:
        kind = jax.devices()[0].device_kind.lower()
    except Exception:
        kind = ""
    if ("v5 lite" in kind) or ("v5e" in kind) or ("v5litepod" in kind):
        # v5e: 197 TF/s vs ~0.82 TB/s -> balance ~240 FLOP/byte; tm=256 already near it.
        return dict(tm=256, t_ff=512, lane_mult=128,
                    vmem_limit_bytes=64 * 1024 * 1024, two_core=False)
    if ("v6" in kind) or ("trillium" in kind):
        # v6e: 918 TF/s vs ~1.4 TB/s -> needs tm ~640+; 128 MiB VMEM allows tm=1024.
        return dict(tm=1024, t_ff=256, lane_mult=256,
                    vmem_limit_bytes=100 * 1024 * 1024, two_core=False)
    if ("v7" in kind) or ("tpu7" in kind):
        # v7x: 64 MiB VMEM per TC caps tm ~512 (with bf16 out); 2 TCs -> keep >=2 row tiles.
        return dict(tm=512, t_ff=256, lane_mult=256,
                    vmem_limit_bytes=56 * 1024 * 1024, two_core=True)
    # Unknown / older generation: conservative middle ground.
    return dict(tm=512, t_ff=256, lane_mult=128,
                vmem_limit_bytes=64 * 1024 * 1024, two_core=False)


# ----------------------------------------------------------------- hoisted weight prep

def prepare_ffn_params(w1, b1, w2, b2, *, compute_dtype=jnp.bfloat16,
                       t_ff=None, lane_mult=None):
    """Pad + cast the FFN weights ONCE (call at init; reuse the result every forward).

    w1: [d_model, d_ff]; b1: [d_ff]; w2: [d_ff, d_model]; b2: [d_model].
    """
    cfg = _device_defaults()
    if t_ff is None:
        t_ff = cfg["t_ff"]
    if lane_mult is None:
        lane_mult = cfg["lane_mult"]

    d_model, d_ff = w1.shape

    d_model_p = _round_up(d_model, lane_mult)
    # Reduction tile over d_ff (multiple of 128, clamped to the padded extent).
    t_ff = max(128, _round_up(min(t_ff, _round_up(d_ff, 128)), 128))
    d_ff_p = _round_up(d_ff, t_ff)

    # Zero padding is exact: padded d_ff lanes give GELU(0)=0 against zero W2 rows;
    # padded d_model output lanes are sliced off in feed_forward().
    w1_p = jnp.pad(w1, ((0, d_model_p - d_model), (0, d_ff_p - d_ff))).astype(compute_dtype)
    w2_p = jnp.pad(w2, ((0, d_ff_p - d_ff), (0, d_model_p - d_model))).astype(compute_dtype)
    b1_p = jnp.pad(b1, (0, d_ff_p - d_ff)).reshape(1, d_ff_p).astype(jnp.float32)
    b2_p = jnp.pad(b2, (0, d_model_p - d_model)).reshape(1, d_model_p).astype(jnp.float32)

    return dict(w1=w1_p, b1=b1_p, w2=w2_p, b2=b2_p,
                d_model=d_model, d_ff=d_ff,
                d_model_p=d_model_p, d_ff_p=d_ff_p, t_ff=t_ff,
                compute_dtype=compute_dtype)


# ----------------------------------------------------------------------------- wrapper

def feed_forward(x, params, *, tm=None, vmem_limit_bytes=None, out_dtype=None,
                 weight_buffer_count=2):
    """x: [B, S, d_model]; params: output of prepare_ffn_params()."""
    cfg = _device_defaults()
    if tm is None:
        tm = cfg["tm"]
    if vmem_limit_bytes is None:
        vmem_limit_bytes = cfg["vmem_limit_bytes"]

    compute_dtype = params["compute_dtype"]
    if out_dtype is None:
        out_dtype = compute_dtype  # bf16 output: halves output VMEM + HBM writeback

    B, S, d_model = x.shape
    assert d_model == params["d_model"], "x last dim must match prepared d_model"
    d_model_p = params["d_model_p"]
    d_ff_p = params["d_ff_p"]
    t_ff = params["t_ff"]
    n_rows = B * S

    # v7x: keep >= 2 row tiles so the "parallel" axis shards across both TensorCores.
    if cfg["two_core"] and n_rows >= 16:
        tm = min(tm, _round_up((n_rows + 1) // 2, 8))
    # Row tile: multiple of 8, clamped so tiny inputs don't over-pad.
    tm = max(8, _round_up(min(tm, _round_up(n_rows, 8)), 8))
    n_rows_p = _round_up(n_rows, tm)

    # Only the activation is padded/cast per call (weights were prepared once).
    x2 = jnp.pad(x.reshape(n_rows, d_model),
                 ((0, n_rows_p - n_rows), (0, d_model_p - d_model))).astype(compute_dtype)

    grid = (n_rows_p // tm, d_ff_p // t_ff)

    def _w_spec(shape, index_map):
        # Optional deeper buffering on the two streaming weight inputs only.
        if weight_buffer_count != 2:
            return pl.BlockSpec(shape, index_map,
                                pipeline_mode=pl.Buffered(weight_buffer_count))
        return pl.BlockSpec(shape, index_map)

    out = pl.pallas_call(
        _ffn_kernel,
        out_shape=jax.ShapeDtypeStruct((n_rows_p, d_model_p), out_dtype),
        grid_spec=pltpu.PrefetchScalarGridSpec(
            num_scalar_prefetch=0,
            grid=grid,
            in_specs=[
                pl.BlockSpec((tm, d_model_p), lambda i, k: (i, 0)),     # x row tile
                _w_spec((d_model_p, t_ff), lambda i, k: (0, k)),        # W1 column tile
                pl.BlockSpec((1, t_ff), lambda i, k: (0, k)),           # b1 tile (f32)
                _w_spec((t_ff, d_model_p), lambda i, k: (k, 0)),        # W2 row tile
                pl.BlockSpec((1, d_model_p), lambda i, k: (0, 0)),      # b2 (f32)
            ],
            out_specs=pl.BlockSpec((tm, d_model_p), lambda i, k: (i, 0)),
            scratch_shapes=[pltpu.VMEM((tm, d_model_p), jnp.float32)],  # f32 accumulator
        ),
        compiler_params=pltpu.CompilerParams(
            dimension_semantics=("parallel", "arbitrary"),
            vmem_limit_bytes=vmem_limit_bytes,
        ),
    )(x2, params["w1"], params["b1"], params["w2"], params["b2"])

    return out[:n_rows, :d_model].reshape(B, S, d_model)


# ------------------------------------------------------------------------- test helpers

def _init_params(key, d_model, d_ff, dtype=jnp.float32):
    """Deterministic init mirroring torch.nn.Linear's default U(-1/sqrt(fan_in), ...)."""
    k1, k2, k3, k4 = jax.random.split(key, 4)
    lim1 = 1.0 / math.sqrt(d_model)
    lim2 = 1.0 / math.sqrt(d_ff)
    # stored as (in, out) so the kernel computes x @ W directly
    w1 = jax.random.uniform(k1, (d_model, d_ff), dtype, -lim1, lim1)
    b1 = jax.random.uniform(k2, (d_ff,), dtype, -lim1, lim1)
    w2 = jax.random.uniform(k3, (d_ff, d_model), dtype, -lim2, lim2)
    b2 = jax.random.uniform(k4, (d_model,), dtype, -lim2, lim2)
    return w1, b1, w2, b2


def _reference(x, w1, b1, w2, b2, compute_dtype=jnp.bfloat16, out_dtype=None):
    """Matches the kernel's bf16-input / f32-accumulate matmuls with exact-erf GELU."""
    if out_dtype is None:
        out_dtype = compute_dtype
    xc = x.astype(compute_dtype).astype(jnp.float32)
    w1c = w1.astype(compute_dtype).astype(jnp.float32)
    w2c = w2.astype(compute_dtype).astype(jnp.float32)
    h = xc @ w1c + b1.astype(jnp.float32)
    h = 0.5 * h * (1.0 + jax.lax.erf(h * _INV_SQRT2))
    hc = h.astype(compute_dtype).astype(jnp.float32)
    return (hc @ w2c + b2.astype(jnp.float32)).astype(out_dtype)


if __name__ == "__main__":
    key = jax.random.PRNGKey(0)
    kx, kp, kx2, kp2 = jax.random.split(key, 4)

    # TODO(synk): dropout (p=0.1) omitted — module evaluated in inference mode (identity).

    # --- Test 1: small shapes from the module spec (single k-step / single row tile) ---
    batch, seq, d_model, d_ff = 2, 8, 32, 64
    x = jax.random.normal(kx, (batch, seq, d_model), jnp.float32)
    w1, b1, w2, b2 = _init_params(kp, d_model, d_ff)
    params = prepare_ffn_params(w1, b1, w2, b2)   # weights padded/cast ONCE, outside the call
    y = jax.block_until_ready(feed_forward(x, params))
    y_ref = _reference(x, w1, b1, w2, b2, out_dtype=y.dtype)
    assert y.shape == (batch, seq, d_model)
    assert jnp.allclose(y.astype(jnp.float32), y_ref.astype(jnp.float32),
                        atol=3e-2, rtol=3e-2), "mismatch vs JAX reference (test 1)"

    # --- Test 2: exercises the multi-step reduction (d_ff > t_ff) and multiple row tiles ---
    batch2, seq2, d_model2, d_ff2 = 4, 128, 128, 512
    x_b = jax.random.normal(kx2, (batch2, seq2, d_model2), jnp.float32)
    w1b, b1b, w2b, b2b = _init_params(kp2, d_model2, d_ff2)
    params2 = prepare_ffn_params(w1b, b1b, w2b, b2b, t_ff=256)     # 2 reduction steps
    y2 = jax.block_until_ready(feed_forward(x_b, params2, tm=128))  # 4 row tiles
    y2_ref = _reference(x_b, w1b, b1b, w2b, b2b, out_dtype=y2.dtype)
    assert y2.shape == (batch2, seq2, d_model2)
    assert jnp.allclose(y2.astype(jnp.float32), y2_ref.astype(jnp.float32),
                        atol=3e-2, rtol=3e-2), "mismatch vs JAX reference (test 2)"

    print("KERNEL_OK")
</pallas_src>

<mosaic_0001>
module attributes {stable_mosaic.version = 11 : i64} {
  func.func @_ffn_kernel(%arg0: i32, %arg1: i32, %arg2: memref<16x128xbf16, #tpu.memory_space<vmem>>, %arg3: memref<128x128xbf16, #tpu.memory_space<vmem>>, %arg4: memref<1x128xf32, #tpu.memory_space<vmem>>, %arg5: memref<128x128xbf16, #tpu.memory_space<vmem>>, %arg6: memref<1x128xf32, #tpu.memory_space<vmem>>, %arg7: memref<16x128xbf16, #tpu.memory_space<vmem>>, %arg8: memref<16x128xf32, #tpu.memory_space<vmem>>) attributes {dimension_semantics = [#tpu.dimension_semantics<parallel>, #tpu.dimension_semantics<arbitrary>], iteration_bounds = array<i64: 1, 1>, scalar_prefetch = 0 : i64, scratch_operands = 1 : i64, tpu.core_type = #tpu.core_type<tc>, window_params = [{transform_indices = @transform_0, window_bounds = array<i64: 16, 128>}, {transform_indices = @transform_1, window_bounds = array<i64: 128, 128>}, {transform_indices = @transform_2, window_bounds = array<i64: 1, 128>}, {transform_indices = @transform_3, window_bounds = array<i64: 128, 128>}, {pipeline_mode = #tpu.pipeline_mode<synchronous>, transform_indices = @transform_4, window_bounds = array<i64: 1, 128>}, {transform_indices = @transform_5, window_bounds = array<i64: 16, 128>}]} {
    %c0_i32 = arith.constant 0 : i32
    %0 = arith.cmpi eq, %arg1, %c0_i32 : i32
    %1 = arith.extui %0 : i1 to i32
    %c0_i32_0 = arith.constant 0 : i32
    %2 = arith.cmpi ne, %1, %c0_i32_0 : i32
    scf.if %2 {
      %c0_18 = arith.constant 0 : index
      %c0_19 = arith.constant 0 : index
      %26 = vector.load %arg6[%c0_18, %c0_19] : memref<1x128xf32, #tpu.memory_space<vmem>>, vector<1x128xf32>
      %27 = vector.shape_cast %26 : vector<1x128xf32> to vector<1x128xf32>
      %28 = vector.broadcast %27 : vector<1x128xf32> to vector<16x128xf32>
      %c0_20 = arith.constant 0 : index
      %c0_21 = arith.constant 0 : index
      %29 = vector.load %arg8[%c0_20, %c0_21] : memref<16x128xf32, #tpu.memory_space<vmem>>, vector<16x128xf32>
      tpu.vector_store %arg8[%c0_20, %c0_21], %28 {strides = array<i32>} : memref<16x128xf32, #tpu.memory_space<vmem>>, vector<16x128xf32>,
    } else {
    }
    %c0 = arith.constant 0 : index
    %c0_1 = arith.constant 0 : index
    %3 = vector.load %arg2[%c0, %c0_1] : memref<16x128xbf16, #tpu.memory_space<vmem>>, vector<16x128xbf16>
    %c0_2 = arith.constant 0 : index
    %c0_3 = arith.constant 0 : index
    %4 = vector.load %arg3[%c0_2, %c0_3] : memref<128x128xbf16, #tpu.memory_space<vmem>>, vector<128x128xbf16>
    %cst = arith.constant dense<0.000000e+00> : vector<16x128xf32>
    %5 = tpu.matmul %3, %4, %cst {dimension_numbers = #tpu.dot_dimension_numbers<[1], [0], [0], [1], [0, 0, 1, 1], [], []>} : vector<16x128xbf16>, vector<128x128xbf16>, vector<16x128xf32> -> vector<16x128xf32>
    %c0_4 = arith.constant 0 : index
    %c0_5 = arith.constant 0 : index
    %6 = vector.load %arg4[%c0_4, %c0_5] : memref<1x128xf32, #tpu.memory_space<vmem>>, vector<1x128xf32>
    %7 = vector.broadcast %6 : vector<1x128xf32> to vector<16x128xf32>
    %8 = arith.addf %5, %7 : vector<16x128xf32>
    %cst_6 = arith.constant 5.000000e-01 : f32
    %9 = vector.broadcast %cst_6 : f32 to vector<16x128xf32>
    %10 = arith.mulf %9, %8 : vector<16x128xf32>
    %cst_7 = arith.constant 0.707106769 : f32
    %11 = vector.broadcast %cst_7 : f32 to vector<16x128xf32>
    %12 = arith.mulf %8, %11 : vector<16x128xf32>
    %13 = math.erf %12 : vector<16x128xf32>
    %cst_8 = arith.constant 1.000000e+00 : f32
    %14 = vector.broadcast %cst_8 : f32 to vector<16x128xf32>
    %15 = arith.addf %14, %13 : vector<16x128xf32>
    %16 = arith.mulf %10, %15 : vector<16x128xf32>
    %c0_9 = arith.constant 0 : index
    %c0_10 = arith.constant 0 : index
    %17 = vector.load %arg8[%c0_9, %c0_10] : memref<16x128xf32, #tpu.memory_space<vmem>>, vector<16x128xf32>
    %18 = arith.truncf %16 : vector<16x128xf32> to vector<16x128xbf16>
    %c0_11 = arith.constant 0 : index
    %c0_12 = arith.constant 0 : index
    %19 = vector.load %arg5[%c0_11, %c0_12] : memref<128x128xbf16, #tpu.memory_space<vmem>>, vector<128x128xbf16>
    %cst_13 = arith.constant dense<0.000000e+00> : vector<16x128xf32>
    %20 = tpu.matmul %18, %19, %cst_13 {dimension_numbers = #tpu.dot_dimension_numbers<[1], [0], [0], [1], [0, 0, 1, 1], [], []>} : vector<16x128xbf16>, vector<128x128xbf16>, vector<16x128xf32> -> vector<16x128xf32>
    %21 = arith.addf %17, %20 : vector<16x128xf32>
    %c0_14 = arith.constant 0 : index
    %c0_15 = arith.constant 0 : index
    %22 = vector.load %arg8[%c0_14, %c0_15] : memref<16x128xf32, #tpu.memory_space<vmem>>, vector<16x128xf32>
    tpu.vector_store %arg8[%c0_14, %c0_15], %21 {strides = array<i32>} : memref<16x128xf32, #tpu.memory_space<vmem>>, vector<16x128xf32>,
    %c0_i32_16 = arith.constant 0 : i32
    %23 = arith.cmpi eq, %arg1, %c0_i32_16 : i32
    %24 = arith.extui %23 : i1 to i32
    %c0_i32_17 = arith.constant 0 : i32
    %25 = arith.cmpi ne, %24, %c0_i32_17 : i32
    scf.if %25 {
      %c0_18 = arith.constant 0 : index
      %c0_19 = arith.constant 0 : index
      %26 = vector.load %arg8[%c0_18, %c0_19] : memref<16x128xf32, #tpu.memory_space<vmem>>, vector<16x128xf32>
      %27 = arith.truncf %26 : vector<16x128xf32> to vector<16x128xbf16>
      %c0_20 = arith.constant 0 : index
      %c0_21 = arith.constant 0 : index
      %28 = vector.load %arg7[%c0_20, %c0_21] : memref<16x128xbf16, #tpu.memory_space<vmem>>, vector<16x128xbf16>
      tpu.vector_store %arg7[%c0_20, %c0_21], %27 {strides = array<i32>} : memref<16x128xbf16, #tpu.memory_space<vmem>>, vector<16x128xbf16>,
    } else {
    }
    return
  }
  func.func @transform_0(%arg0: i32, %arg1: i32) -> (i32, i32) {
    %c0_i32 = arith.constant 0 : i32
    %c0_i32_0 = arith.constant 0 : i32
    return %arg0, %c0_i32 : i32, i32
  }
  func.func @transform_1(%arg0: i32, %arg1: i32) -> (i32, i32) {
    %c0_i32 = arith.constant 0 : i32
    %c0_i32_0 = arith.constant 0 : i32
    return %c0_i32, %arg1 : i32, i32
  }
  func.func @transform_2(%arg0: i32, %arg1: i32) -> (i32, i32) {
    %c0_i32 = arith.constant 0 : i32
    %c0_i32_0 = arith.constant 0 : i32
    return %c0_i32, %arg1 : i32, i32
  }
  func.func @transform_3(%arg0: i32, %arg1: i32) -> (i32, i32) {
    %c0_i32 = arith.constant 0 : i32
    %c0_i32_0 = arith.constant 0 : i32
    return %arg1, %c0_i32 : i32, i32
  }
  func.func @transform_4(%arg0: i32, %arg1: i32) -> (i32, i32) {
    %c0_i32 = arith.constant 0 : i32
    %c0_i32_0 = arith.constant 0 : i32
    %c0_i32_1 = arith.constant 0 : i32
    return %c0_i32, %c0_i32_0 : i32, i32
  }
  func.func @transform_5(%arg0: i32, %arg1: i32) -> (i32, i32) {
    %c0_i32 = arith.constant 0 : i32
    %c0_i32_0 = arith.constant 0 : i32
    return %arg0, %c0_i32 : i32, i32
  }
}

</mosaic_0001>

<llo_original>
// kernel: tpu_custom_call.1
$region0: #{tpu_custom_call.1}
  #allocation0 [shape = 'u32[]', space=smem, size = 0x4, offset = 0x4, fixed_abs, tag = 'smem constant byte address 0x4 - core index']
  #allocation1 [shape = 'u32[144,128]{1,0:T(1,128)}', space=vmem, size = 0x12000, scoped, tag = 'internal scratch']
  #allocation2 [shape = 'f32[16,128]{1,0:T(8,128)}', space=vmem, size = 0x2000, scoped, tag = 'scratch operand']
  %s0 = inlined_call_operand.hbm [shape: bf16[16,128], index: 0, kind: input, shape index: {}]
  %s1 = inlined_call_operand.hbm [shape: bf16[128,128], index: 1, kind: input, shape index: {}]
  %s2 = inlined_call_operand.vmem [shape: f32[1,128], index: 2, kind: input, shape index: {}]
  %s3 = inlined_call_operand.hbm [shape: bf16[128,128], index: 3, kind: input, shape index: {}]
  %s4 = inlined_call_operand.vmem [shape: f32[1,128], index: 4, kind: input, shape index: {}]
  %s5 = inlined_call_operand.hbm [shape: bf16[16,128], index: 5, kind: output, shape index: {}]
  %s6 = sld [smem:[#allocation0]]
  $region50: #{tpu_custom_call.1} parent=0
    _
  %s8 = ssub.s32 1, %s6
  %s9 = scalar_select 0, %s8, %s6
  $region1: #{tpu_custom_call.1} parent=0
    #allocation3 [shape = 'u8[4096]{0}', space=vmem, size = 0x1000, scoped, tag = 'input window, operand 0, single buffered']
    #allocation4 [shape = 's32[1]{0}', space=sflag, size = 0x4, scoped, tag = 'scoped memory for tpu_custom_call.1']
    #allocation5 [shape = 's32[1]{0}', space=sflag, size = 0x4, scoped, tag = 'scoped memory for tpu_custom_call.1']
    #allocation6 [shape = 'u8[32768]{0}', space=vmem, size = 0x8000, scoped, tag = 'input window, operand 1, single buffered']
    #allocation7 [shape = 's32[1]{0}', space=sflag, size = 0x4, scoped, tag = 'scoped memory for tpu_custom_call.1']
    #allocation8 [shape = 'u8[32768]{0}', space=vmem, size = 0x8000, scoped, tag = 'input window, operand 3, single buffered']
    #allocation9 [shape = 'u8[4096]{0}', space=vmem, size = 0x1000, scoped, tag = 'output window, operand 0, single buffered']
    %10 = vsyncpa [#allocation4], 0
    %11 = vsyncpa [#allocation7], 0
    %12 = vsyncpa [#allocation5], 0
    // Predicated region
    $region2: #{tpu_custom_call.1} parent=1 // pred_check
      _
    $region3: #{tpu_custom_call.1} parent=1 // pred_check_branch
      %14 = sbr.rel (0) target = $region5
    $region4: #{tpu_custom_call.1} parent=1 // pred_region
      %s16 = ssub.s32 128, 128
      %17 = vsyncadd [#allocation4], %s16
      %s18 = sshll.u32 [#allocation3], 4
      %s19 = int_to_ptr.vmem [resolvable:$true] %s18
      %24 = dma.hbm_to_vmem [thread:$0]  %s0, 128, %s19, [#allocation4], 64, 64, 4
    $region5: #{tpu_custom_call.1} parent=1 // pred_fallthru
      _
    // Predicated region
    $region6: #{tpu_custom_call.1} parent=1 // pred_check
      _
    $region7: #{tpu_custom_call.1} parent=1 // pred_check_branch
      %26 = sbr.rel (0) target = $region9
    $region8: #{tpu_custom_call.1} parent=1 // pred_region
      %s28 = ssub.s32 1024, 1024
      %29 = vsyncadd [#allocation7], %s28
      %s30 = sshll.u32 [#allocation6], 4
      %s31 = int_to_ptr.vmem [resolvable:$true] %s30
      %36 = dma.hbm_to_vmem [thread:$0]  %s1, 1024, %s31, [#allocation7], 64, 64, 4
    $region9: #{tpu_custom_call.1} parent=1 // pred_fallthru
      _
    // Predicated region
    $region10: #{tpu_custom_call.1} parent=1 // pred_check
      _
    $region11: #{tpu_custom_call.1} parent=1 // pred_check_branch
      %38 = sbr.rel (0) target = $region13
    $region12: #{tpu_custom_call.1} parent=1 // pred_region
      _
    $region13: #{tpu_custom_call.1} parent=1 // pred_fallthru
      _
    // Predicated region
    $region14: #{tpu_custom_call.1} parent=1 // pred_check
      _
    $region15: #{tpu_custom_call.1} parent=1 // pred_check_branch
      %40 = sbr.rel (0) target = $region17
    $region16: #{tpu_custom_call.1} parent=1 // pred_region
      %s42 = ssub.s32 1024, 1024
      %43 = vsyncadd [#allocation7], %s42
      %s44 = sshll.u32 [#allocation8], 4
      %s45 = int_to_ptr.vmem [resolvable:$true] %s44
      %50 = dma.hbm_to_vmem [thread:$0]  %s3, 1024, %s45, [#allocation7], 64, 64, 4
    $region17: #{tpu_custom_call.1} parent=1 // pred_fallthru
      _
    // Predicated region
    $region18: #{tpu_custom_call.1} parent=1 // pred_check
      _
    $region19: #{tpu_custom_call.1} parent=1 // pred_check_branch
      %52 = sbr.rel (0) target = $region21
    $region20: #{tpu_custom_call.1} parent=1 // pred_region
      _
    $region21: #{tpu_custom_call.1} parent=1 // pred_fallthru
      _
    // Predicated region
    $region22: #{tpu_custom_call.1} parent=1 // pred_check
      _
    $region23: #{tpu_custom_call.1} parent=1 // pred_check_branch
      %54 = sbr.rel (0) target = $region25
    $region24: #{tpu_custom_call.1} parent=1 // pred_region
      %55 = dma.done [#allocation4], 128
    $region25: #{tpu_custom_call.1} parent=1 // pred_fallthru
      _
    // Predicated region
    $region26: #{tpu_custom_call.1} parent=1 // pred_check
      _
    $region27: #{tpu_custom_call.1} parent=1 // pred_check_branch
      %57 = sbr.rel (0) target = $region29
    $region28: #{tpu_custom_call.1} parent=1 // pred_region
      %58 = dma.done [#allocation7], 1024
    $region29: #{tpu_custom_call.1} parent=1 // pred_fallthru
      _
    // Predicated region
    $region30: #{tpu_custom_call.1} parent=1 // pred_check
      _
    $region31: #{tpu_custom_call.1} parent=1 // pred_check_branch
      %60 = sbr.rel (0) target = $region33
    $region32: #{tpu_custom_call.1} parent=1 // pred_region
      %61 = dma.done [#allocation7], 1024
    $region33: #{tpu_custom_call.1} parent=1 // pred_fallthru
      _
    %p63 = scmp.eq.s32.totalorder 0, 0
    // Predicated region
    $region34: #{tpu_custom_call.1} parent=1 // pred_check
      %p64 = pneg %p63
    $region35: #{tpu_custom_call.1} parent=1 // pred_check_branch
      %66 = sbr.rel (%p64) target = $region37
    $region36: #{tpu_custom_call.1} parent=1 // pred_region
      %v67 = vld [vmem:[%s4] sm:$0x1]
      %v69 = vlaneseq
      %v70 = vshrl.u32 %v69, 7
      %v71 = vsub.s32 0, %v70
      %v72 = vrot.slane %v67, %v71
      %74 = vst [vmem:[#allocation2] sm:$0xff] %v72
      %75 = vst [vmem:[#allocation2 + $0x8] sm:$0xff] %v72
    $region37: #{tpu_custom_call.1} parent=1 // pred_fallthru
      _
    %v76 = vld [vmem:[#allocation3] sm:$0xf]
    %v77 = vld [vmem:[#allocation3 + $0x4] sm:$0xf]
    %v78 = vld [vmem:[#allocation6] sm:$0xf]
    %v79 = vld [vmem:[#allocation6 + $0x4] sm:$0xf]
    %v80 = vld [vmem:[#allocation6 + $0x8] sm:$0xf]
    %v81 = vld [vmem:[#allocation6 + $0xc] sm:$0xf]
    %v82 = vld [vmem:[#allocation6 + $0x10] sm:$0xf]
    %v83 = vld [vmem:[#allocation6 + $0x14] sm:$0xf]
    %v84 = vld [vmem:[#allocation6 + $0x18] sm:$0xf]
    %v85 = vld [vmem:[#allocation6 + $0x1c] sm:$0xf]
    %v86 = vld [vmem:[#allocation6 + $0x20] sm:$0xf]
    %v87 = vld [vmem:[#allocation6 + $0x24] sm:$0xf]
    %v88 = vld [vmem:[#allocation6 + $0x28] sm:$0xf]
    %v89 = vld [vmem:[#allocation6 + $0x2c] sm:$0xf]
    %v90 = vld [vmem:[#allocation6 + $0x30] sm:$0xf]
    %v91 = vld [vmem:[#allocation6 + $0x34] sm:$0xf]
    %v92 = vld [vmem:[#allocation6 + $0x38] sm:$0xf]
    %v93 = vld [vmem:[#allocation6 + $0x3c] sm:$0xf]
    %v94 = vld [vmem:[%s2] sm:$0x1]
    %v96 = vlaneseq
    %v97 = vshrl.u32 %v96, 7
    %v98 = vsub.s32 0, %v97
    %v99 = vrot.slane %v94, %v98
    %v103 = vunpack.c.l.b16 %v76
    %v104 = vunpack.c.l.b16 %v77
    %v105 = vpack.c.b16 %v104, %v103
    %v123 = vunpack.c.l.b16 %v78
    %v124 = vunpack.c.l.b16 %v79
    %v125 = vunpack.c.l.b16 %v80
    %v126 = vunpack.c.l.b16 %v81
    %v127 = vunpack.c.l.b16 %v82
    %v128 = vunpack.c.l.b16 %v83
    %v129 = vunpack.c.l.b16 %v84
    %v130 = vunpack.c.l.b16 %v85
    %v131 = vunpack.c.l.b16 %v86
    %v132 = vunpack.c.l.b16 %v87
    %v133 = vunpack.c.l.b16 %v88
    %v134 = vunpack.c.l.b16 %v89
    %v135 = vunpack.c.l.b16 %v90
    %v136 = vunpack.c.l.b16 %v91
    %v137 = vunpack.c.l.b16 %v92
    %v138 = vunpack.c.l.b16 %v93
    %v139 = vpack.c.b16 %v124, %v123
    %v140 = vpack.c.b16 %v126, %v125
    %v141 = vpack.c.b16 %v128, %v127
    %v142 = vpack.c.b16 %v130, %v129
    %v143 = vpack.c.b16 %v132, %v131
    %v144 = vpack.c.b16 %v134, %v133
    %v145 = vpack.c.b16 %v136, %v135
    %v146 = vpack.c.b16 %v138, %v137
    %155 = vmatprep.subr.bf16.mxu0 0
    %156 = vmatpush1.bf16.msra.mxu0 %v146
    %157 = vmatprep.subr.bf16.mxu0 0
    %158 = vmatpush1.bf16.msra.mxu0 %v145
    %159 = vmatprep.subr.bf16.mxu0 0
    %160 = vmatpush1.bf16.msra.mxu0 %v144
    %161 = vmatprep.subr.bf16.mxu0 0
    %162 = vmatpush1.bf16.msra.mxu0 %v143
    %163 = vmatprep.subr.bf16.mxu0 0
    %164 = vmatpush1.bf16.msra.mxu0 %v142
    %165 = vmatprep.subr.bf16.mxu0 0
    %166 = vmatpush1.bf16.msra.mxu0 %v141
    %167 = vmatprep.subr.bf16.mxu0 0
    %168 = vmatpush1.bf16.msra.mxu0 %v140
    %169 = vmatprep.subr.bf16.mxu0 0
    %170 = vmatpush1.bf16.msra.mxu0 %v139
    %171 = vmatprep.subr.bf16.mxu0 0
    %172 = vmatpush2.bf16.msra.mxu0 0
    %173 = vmatprep.subr.bf16.mxu0 0
    %174 = vmatpush2.bf16.msra.mxu0 0
    %175 = vmatprep.subr.bf16.mxu0 0
    %176 = vmatpush2.bf16.msra.mxu0 0
    %177 = vmatprep.subr.bf16.mxu0 0
    %178 = vmatpush2.bf16.msra.mxu0 0
    %179 = vmatprep.subr.bf16.mxu0 0
    %180 = vmatpush2.bf16.msra.mxu0 0
    %181 = vmatprep.subr.bf16.mxu0 0
    %182 = vmatpush2.bf16.msra.mxu0 0
    %183 = vmatprep.subr.bf16.mxu0 0
    %184 = vmatpush2.bf16.msra.mxu0 0
    %185 = vmatprep.subr.bf16.mxu0 0
    %186 = vmatpush2.bf16.msra.mxu0 0
    %187 = vmatprep.mubr.bf16.mxu0 0
    %188 = vmatmul.mubr.bf16.gmra.mxu0 %v105
    %v189 = vpop.f32.mrf.mxu0
    %v190 = vadd.f32 %v99, %v189
    %v191 = vpop.f32.mrf.mxu0
    %v192 = vpop.f32.mrf.mxu0
    %v193 = vadd.f32 %v99, %v192
    %v194 = vpop.f32.mrf.mxu0
    %195 = vdwg.mxu0
    %v196 = vmul.f32 %v190, 0.5
    %v197 = vmul.f32 %v193, 0.5
    %v198 = vmul.f32 %v190, 0.70710677
    %v199 = vmul.f32 %v193, 0.70710677
    %v200 = verf.f32.pop %v198
    %v201 = verf.f32.pop %v199
    %v202 = vadd.f32 %v200, 1.0
    %v203 = vadd.f32 %v201, 1.0
    %v204 = vmul.f32 %v196, %v202
    %v205 = vmul.f32 %v197, %v203
    %v206 = vld [vmem:[#allocation2] sm:$0xff]
    %v207 = vld [vmem:[#allocation2 + $0x8] sm:$0xff]
    %v208 = vpack.c.bf16 %v205, %v204
    %v209 = vld [vmem:[#allocation8] sm:$0xf]
    %v210 = vld [vmem:[#allocation8 + $0x4] sm:$0xf]
    %v211 = vld [vmem:[#allocation8 + $0x8] sm:$0xf]
    %v212 = vld [vmem:[#allocation8 + $0xc] sm:$0xf]
    %v213 = vld [vmem:[#allocation8 + $0x10] sm:$0xf]
    %v214 = vld [vmem:[#allocation8 + $0x14] sm:$0xf]
    %v215 = vld [vmem:[#allocation8 + $0x18] sm:$0xf]
    %v216 = vld [vmem:[#allocation8 + $0x1c] sm:$0xf]
    %v217 = vld [vmem:[#allocation8 + $0x20] sm:$0xf]
    %v218 = vld [vmem:[#allocation8 + $0x24] sm:$0xf]
    %v219 = vld [vmem:[#allocation8 + $0x28] sm:$0xf]
    %v220 = vld [vmem:[#allocation8 + $0x2c] sm:$0xf]
    %v221 = vld [vmem:[#allocation8 + $0x30] sm:$0xf]
    %v222 = vld [vmem:[#allocation8 + $0x34] sm:$0xf]
    %v223 = vld [vmem:[#allocation8 + $0x38] sm:$0xf]
    %v224 = vld [vmem:[#allocation8 + $0x3c] sm:$0xf]
    %v241 = vunpack.c.l.b16 %v209
    %v242 = vunpack.c.l.b16 %v210
    %v243 = vunpack.c.l.b16 %v211
    %v244 = vunpack.c.l.b16 %v212
    %v245 = vunpack.c.l.b16 %v213
    %v246 = vunpack.c.l.b16 %v214
    %v247 = vunpack.c.l.b16 %v215
    %v248 = vunpack.c.l.b16 %v216
    %v249 = vunpack.c.l.b16 %v217
    %v250 = vunpack.c.l.b16 %v218
    %v251 = vunpack.c.l.b16 %v219
    %v252 = vunpack.c.l.b16 %v220
    %v253 = vunpack.c.l.b16 %v221
    %v254 = vunpack.c.l.b16 %v222
    %v255 = vunpack.c.l.b16 %v223
    %v256 = vunpack.c.l.b16 %v224
    %v257 = vpack.c.b16 %v242, %v241
    %v258 = vpack.c.b16 %v244, %v243
    %v259 = vpack.c.b16 %v246, %v245
    %v260 = vpack.c.b16 %v248, %v247
    %v261 = vpack.c.b16 %v250, %v249
    %v262 = vpack.c.b16 %v252, %v251
    %v263 = vpack.c.b16 %v254, %v253
    %v264 = vpack.c.b16 %v256, %v255
    %273 = vmatprep.subr.bf16.mxu0 0
    %274 = vmatpush1.bf16.msra.mxu0 %v264
    %275 = vmatprep.subr.bf16.mxu0 0
    %276 = vmatpush1.bf16.msra.mxu0 %v263
    %277 = vmatprep.subr.bf16.mxu0 0
    %278 = vmatpush1.bf16.msra.mxu0 %v262
    %279 = vmatprep.subr.bf16.mxu0 0
    %280 = vmatpush1.bf16.msra.mxu0 %v261
    %281 = vmatprep.subr.bf16.mxu0 0
    %282 = vmatpush1.bf16.msra.mxu0 %v260
    %283 = vmatprep.subr.bf16.mxu0 0
    %284 = vmatpush1.bf16.msra.mxu0 %v259
    %285 = vmatprep.subr.bf16.mxu0 0
    %286 = vmatpush1.bf16.msra.mxu0 %v258
    %287 = vmatprep.subr.bf16.mxu0 0
    %288 = vmatpush1.bf16.msra.mxu0 %v257
    %289 = vmatprep.subr.bf16.mxu0 0
    %290 = vmatpush2.bf16.msra.mxu0 0
    %291 = vmatprep.subr.bf16.mxu0 0
    %292 = vmatpush2.bf16.msra.mxu0 0
    %293 = vmatprep.subr.bf16.mxu0 0
    %294 = vmatpush2.bf16.msra.mxu0 0
    %295 = vmatprep.subr.bf16.mxu0 0
    %296 = vmatpush2.bf16.msra.mxu0 0
    %297 = vmatprep.subr.bf16.mxu0 0
    %298 = vmatpush2.bf16.msra.mxu0 0
    %299 = vmatprep.subr.bf16.mxu0 0
    %300 = vmatpush2.bf16.msra.mxu0 0
    %301 = vmatprep.subr.bf16.mxu0 0
    %302 = vmatpush2.bf16.msra.mxu0 0
    %303 = vmatprep.subr.bf16.mxu0 0
    %304 = vmatpush2.bf16.msra.mxu0 0
    %305 = vmatprep.mubr.bf16.mxu0 0
    %306 = vmatmul.mubr.bf16.gmra.mxu0 %v208
    %v307 = vpop.f32.mrf.mxu0
    %v308 = vadd.f32 0.0, %v307
    %v309 = vpop.f32.mrf.mxu0
    %v310 = vpop.f32.mrf.mxu0
    %v311 = vadd.f32 0.0, %v310
    %v312 = vpop.f32.mrf.mxu0
    %313 = vdwg.mxu0
    %v314 = vadd.f32 %v206, %v308
    %v315 = vadd.f32 %v207, %v311
    %316 = vst [vmem:[#allocation2] sm:$0xff] %v314
    %317 = vst [vmem:[#allocation2 + $0x8] sm:$0xff] %v315
    // Predicated region
    $region38: #{tpu_custom_call.1} parent=1 // pred_check
      %p318 = pneg %p63
    $region39: #{tpu_custom_call.1} parent=1 // pred_check_branch
      %320 = sbr.rel (%p318) target = $region41
    $region40: #{tpu_custom_call.1} parent=1 // pred_region
      %v321 = vld [vmem:[#allocation2] sm:$0xff]
      %v322 = vld [vmem:[#allocation2 + $0x8] sm:$0xff]
      %v323 = vpack.c.bf16 %v322, %v321
      %v325 = vunpack.c.l.b16 %v323
      %v326 = vunpack.c.h.b16 %v323
      %v327 = vpack.c.b16 %v325, %v325
      %v328 = vpack.c.b16 %v326, %v326
      %331 = vst [vmem:[#allocation9] sm:$0xf] %v327
      %332 = vst [vmem:[#allocation9 + $0x4] sm:$0xf] %v328
    $region41: #{tpu_custom_call.1} parent=1 // pred_fallthru
      _
    // Predicated region
    $region42: #{tpu_custom_call.1} parent=1 // pred_check
      _
    $region43: #{tpu_custom_call.1} parent=1 // pred_check_branch
      %334 = sbr.rel (0) target = $region45
    $region44: #{tpu_custom_call.1} parent=1 // pred_region
      %s336 = ssub.s32 128, 128
      %337 = vsyncadd [#allocation5], %s336
      %s338 = sshll.u32 [#allocation9], 4
      %s339 = int_to_ptr.vmem [resolvable:$true] %s338
      %344 = dma.vmem_to_hbm [thread:$0]  %s339, 128, %s5, [#allocation5], 64, 64, 4
    $region45: #{tpu_custom_call.1} parent=1 // pred_fallthru
      _
    // Predicated region
    $region46: #{tpu_custom_call.1} parent=1 // pred_check
      _
    $region47: #{tpu_custom_call.1} parent=1 // pred_check_branch
      %346 = sbr.rel (0) target = $region49
    $region48: #{tpu_custom_call.1} parent=1 // pred_region
      %347 = dma.done [#allocation5], 128
    $region49: #{tpu_custom_call.1} parent=1 // pred_fallthru
      _
    %348 = vsyncpa [#allocation4], 1
    %349 = vsyncpa [#allocation7], 1
    %350 = vsyncpa [#allocation5], 1

</llo_original>
